<compile_context>
chip_gen: v7x
topology: tpu7x:2x2x1
jax: 0.10.0
libtpu: 0.0.40
codegen_flags: <defaults>
</compile_context>

<pallas_src>
import jax
import jax.numpy as jnp
from jax.experimental import pallas as pl
from jax.experimental.pallas import tpu as pltpu


def flatten_kernel(x_ref, o_ref):
    # x_ref / o_ref: lane-dense VMEM tiles. Pure copy.
    o_ref[...] = x_ref[...]


def _sublane_multiple(dtype):
    """Sublane packing multiple: 8 for 32-bit, 16 for bf16/f16, 32 for 8-bit."""
    itemsize = jnp.dtype(dtype).itemsize
    return max(8, 32 // itemsize)


def _largest_lane_divisor(total, max_lanes=2048):
    """Largest multiple of 128 (<= max_lanes) that divides `total`; 0 if none."""
    best = 0
    lanes = 128
    limit = min(total, max_lanes)
    while lanes <= limit:
        if total % lanes == 0:
            best = lanes
        lanes += 128
    return best


def _choose_tile_rows(rows, lanes, dtype):
    """Row-tile whose padded double-buffered footprint stays within ~8 MiB,
    aligned to the dtype's sublane multiple, capped so >= 2 grid programs are
    possible (v7x megacore), avoiding a near-empty trailing block."""
    itemsize = jnp.dtype(dtype).itemsize
    sub = _sublane_multiple(dtype)
    lanes_pad = pl.cdiv(lanes, 128) * 128  # VMEM tiles pad the lane dim to 128

    # 2 input + 2 output double buffers; conservative for v7x (64 MiB phys,
    # 32 MiB scoped).  Copy roofline already saturates at 1-4 MiB per buffer.
    budget_bytes = 8 * 1024 * 1024
    tm = budget_bytes // max(1, 4 * lanes_pad * itemsize)
    tm = max(sub, (tm // sub) * sub)

    # Cap so both v7x TensorCores get grid steps (harmless on 1-TC chips).
    half = pl.cdiv(pl.cdiv(rows, 2), sub) * sub
    tm = min(tm, half)

    if tm >= rows:
        # Single block equal to the full extent (exempt from (8,128) rule).
        return rows
    if rows % tm == 0:
        return tm
    # Prefer a nearby tile size that divides rows -> no tiny masked tail step.
    cand = tm
    for _ in range(8):
        cand -= sub
        if cand < sub:
            break
        if rows % cand == 0:
            return cand
    return tm


def flatten(x):
    """Pallas equivalent of `x[:, :, 0, 0]` for x of shape (N, C, 1, 1)."""
    assert x.shape[2] == 1 and x.shape[3] == 1, "spatial dims must be 1"
    n, c = x.shape[0], x.shape[1]
    total = n * c
    dtype = x.dtype
    itemsize = jnp.dtype(dtype).itemsize

    # Pick a lane-dense 2-D presentation of the same contiguous data.
    lanes = _largest_lane_divisor(total)
    if lanes == 0:
        # N*C has no 128 factor (tiny / awkward shapes): present (N, C) directly.
        rows, lanes = n, c
    else:
        rows = total // lanes

    # Zero-cost metadata reshape in the wrapper (row-major order preserved).
    x2d = jnp.reshape(x, (rows, lanes))

    tm = _choose_tile_rows(rows, lanes, dtype)
    grid = (pl.cdiv(rows, tm),)

    out2d = pl.pallas_call(
        flatten_kernel,
        out_shape=jax.ShapeDtypeStruct((rows, lanes), dtype),
        grid=grid,
        in_specs=[pl.BlockSpec((tm, lanes), lambda i: (i, 0))],
        out_specs=pl.BlockSpec((tm, lanes), lambda i: (i, 0)),
        compiler_params=pltpu.CompilerParams(
            dimension_semantics=("parallel",),
        ),
        cost_estimate=pl.CostEstimate(
            flops=0,
            transcendentals=0,
            bytes_accessed=2 * total * itemsize,
        ),
    )(x2d)

    # Back to the module's output shape (another zero-cost metadata reshape).
    return jnp.reshape(out2d, (n, c))


if __name__ == "__main__":
    key = jax.random.PRNGKey(0)

    # The module asserts H == W == 1, so the input is (N, C, 1, 1).
    x = jax.random.normal(key, (2, 4, 1, 1), dtype=jnp.float32)
    out = jax.block_until_ready(flatten(x))
    ref = x[:, :, 0, 0]
    assert out.shape == (2, 4)
    assert out.dtype == x.dtype
    assert jnp.array_equal(out, ref)

    # Second small case exercising the lane-dense multi-step-grid path.
    x2 = jax.random.normal(key, (64, 512, 1, 1), dtype=jnp.float32)
    out2 = jax.block_until_ready(flatten(x2))
    ref2 = x2[:, :, 0, 0]
    assert out2.shape == (64, 512)
    assert jnp.array_equal(out2, ref2)

    print("KERNEL_OK")
</pallas_src>

<mosaic_0001>
module attributes {stable_mosaic.version = 11 : i64} {
  func.func @flatten_kernel(%arg0: i32, %arg1: memref<2x4xf32, #tpu.memory_space<vmem>>, %arg2: memref<2x4xf32, #tpu.memory_space<vmem>>) attributes {dimension_semantics = [#tpu.dimension_semantics<parallel>], iteration_bounds = array<i64: 1>, scalar_prefetch = 0 : i64, scratch_operands = 0 : i64, tpu.core_type = #tpu.core_type<tc>, window_params = [{transform_indices = @transform_0, window_bounds = array<i64: 2, 4>}, {transform_indices = @transform_1, window_bounds = array<i64: 2, 4>}]} {
    %c0 = arith.constant 0 : index
    %c0_0 = arith.constant 0 : index
    %0 = vector.load %arg1[%c0, %c0_0] : memref<2x4xf32, #tpu.memory_space<vmem>>, vector<2x4xf32>
    %c0_1 = arith.constant 0 : index
    %c0_2 = arith.constant 0 : index
    %1 = vector.load %arg2[%c0_1, %c0_2] : memref<2x4xf32, #tpu.memory_space<vmem>>, vector<2x4xf32>
    tpu.vector_store %arg2[%c0_1, %c0_2], %0 {strides = array<i32>} : memref<2x4xf32, #tpu.memory_space<vmem>>, vector<2x4xf32>,
    return
  }
  func.func @transform_0(%arg0: i32) -> (i32, i32) {
    %c0_i32 = arith.constant 0 : i32
    %c0_i32_0 = arith.constant 0 : i32
    return %arg0, %c0_i32 : i32, i32
  }
  func.func @transform_1(%arg0: i32) -> (i32, i32) {
    %c0_i32 = arith.constant 0 : i32
    %c0_i32_0 = arith.constant 0 : i32
    return %arg0, %c0_i32 : i32, i32
  }
}

</mosaic_0001>

<llo_original>
// kernel: tpu_custom_call.1
$region0: #{tpu_custom_call.1}
  #allocation0 [shape = 'u32[]', space=smem, size = 0x4, offset = 0x4, fixed_abs, tag = 'smem constant byte address 0x4 - core index']
  #allocation1 [shape = 'u32[144,128]{1,0:T(1,128)}', space=vmem, size = 0x12000, scoped, tag = 'internal scratch']
  %s0 = inlined_call_operand.hbm [shape: f32[2,4], index: 0, kind: input, shape index: {}]
  %s1 = inlined_call_operand.hbm [shape: f32[2,4], index: 1, kind: output, shape index: {}]
  %s2 = sld [smem:[#allocation0]]
  $region18: #{tpu_custom_call.1} parent=0
    _
  %s4 = ssub.s32 1, %s2
  %s5 = scalar_select 0, %s4, %s2
  $region1: #{tpu_custom_call.1} parent=0
    #allocation2 [shape = 'u8[1024]{0}', space=vmem, size = 0x400, scoped, tag = 'input window, operand 0, single buffered']
    #allocation3 [shape = 's32[1]{0}', space=sflag, size = 0x4, scoped, tag = 'scoped memory for tpu_custom_call.1']
    #allocation4 [shape = 's32[1]{0}', space=sflag, size = 0x4, scoped, tag = 'scoped memory for tpu_custom_call.1']
    #allocation5 [shape = 'u8[1024]{0}', space=vmem, size = 0x400, scoped, tag = 'output window, operand 0, single buffered']
    %6 = vsyncpa [#allocation3], 0
    %7 = vsyncpa [#allocation4], 0
    // Predicated region
    $region2: #{tpu_custom_call.1} parent=1 // pred_check
      _
    $region3: #{tpu_custom_call.1} parent=1 // pred_check_branch
      %9 = sbr.rel (0) target = $region5
    $region4: #{tpu_custom_call.1} parent=1 // pred_region
      %s11 = ssub.s32 32, 32
      %12 = vsyncadd [#allocation3], %s11
      %s14 = sshll.u32 [#allocation2], 4
      %s15 = int_to_ptr.vmem [resolvable:$true] %s14
      %17 = dma.hbm_to_vmem [thread:$0]  %s0, 32, %s15, [#allocation3]
    $region5: #{tpu_custom_call.1} parent=1 // pred_fallthru
      _
    // Predicated region
    $region6: #{tpu_custom_call.1} parent=1 // pred_check
      _
    $region7: #{tpu_custom_call.1} parent=1 // pred_check_branch
      %19 = sbr.rel (0) target = $region9
    $region8: #{tpu_custom_call.1} parent=1 // pred_region
      %20 = dma.done [#allocation3], 32
    $region9: #{tpu_custom_call.1} parent=1 // pred_fallthru
      _
    %v21 = vld [vmem:[#allocation2] sm:$0x3]
    %vm22 = vcmask 25600
    %23 = vst.msk [vmem:[#allocation5] sm:$0x3] %vm22, %v21
    // Predicated region
    $region10: #{tpu_custom_call.1} parent=1 // pred_check
      _
    $region11: #{tpu_custom_call.1} parent=1 // pred_check_branch
      %25 = sbr.rel (0) target = $region13
    $region12: #{tpu_custom_call.1} parent=1 // pred_region
      %s27 = ssub.s32 32, 32
      %28 = vsyncadd [#allocation4], %s27
      %s30 = sshll.u32 [#allocation5], 4
      %s31 = int_to_ptr.vmem [resolvable:$true] %s30
      %33 = dma.vmem_to_hbm [thread:$0]  %s31, 32, %s1, [#allocation4]
    $region13: #{tpu_custom_call.1} parent=1 // pred_fallthru
      _
    // Predicated region
    $region14: #{tpu_custom_call.1} parent=1 // pred_check
      _
    $region15: #{tpu_custom_call.1} parent=1 // pred_check_branch
      %35 = sbr.rel (0) target = $region17
    $region16: #{tpu_custom_call.1} parent=1 // pred_region
      %36 = dma.done [#allocation4], 32
    $region17: #{tpu_custom_call.1} parent=1 // pred_fallthru
      _
    %37 = vsyncpa [#allocation3], 1
    %38 = vsyncpa [#allocation4], 1

</llo_original>
